<compile_context>
chip_gen: v5e
topology: v5e:2x2
jax: 0.10.0
libtpu: 0.0.40
codegen_flags: <defaults>
</compile_context>

<pallas_src>
import functools

import jax
import jax.numpy as jnp
from jax.experimental import pallas as pl
from jax.experimental.pallas import tpu as pltpu


def _round_up(x, m):
    return ((x + m - 1) // m) * m


def _detect_phys_vmem_bytes():
    try:
        return int(pltpu.get_tpu_info().vmem_capacity_bytes)
    except Exception:
        return 64 * 1024 * 1024   # conservative fallback: v7x per-TensorCore VMEM


_PHYS_VMEM_BYTES = _detect_phys_vmem_bytes()


# ------------------------------ fused kernel --------------------------------

def _fused_kernel(x_ref, gt_ref, w1_ref, b1_ref, w2_ref, b2_ref, w3_ref, b3_ref,
                  pred_ref, err_ref):
    # x_ref: (TILE_B, D_in) bf16, native row-major layout (batch on sublanes).
    # Contract over D_in on the MXU: (H1, D_in) x (TILE_B, D_in) -> (H1, TILE_B),
    # i.e. the per-tile transpose happens on-chip under the DMA pipeline and
    # activations come out lane-dense with batch on lanes.
    h = jax.lax.dot_general(
        w1_ref[...], x_ref[...],
        dimension_numbers=(((1,), (1,)), ((), ())),
        preferred_element_type=jnp.float32)
    h = jnp.maximum(h + b1_ref[...], 0.0)                      # (H1, TILE_B)
    h = jnp.dot(w2_ref[...], h, preferred_element_type=jnp.float32)
    h = jnp.maximum(h + b2_ref[...], 0.0)                      # (H2, TILE_B)

    # Final (H2 -> 1) layer: VPU multiply + sublane (XLU) reduce — N=1 on the
    # MXU would waste it.
    pred = jnp.sum(h * w3_ref[...], axis=0, keepdims=True) + b3_ref[...]
    pred_ref[...] = pred                                       # (1, TILE_B), lane-dense

    # Per-sample weighted squared error (log() lands on the idle EUP slot).
    # No masking needed: padded lanes are sliced off before the wrapper's sum.
    gt = gt_ref[...]                                           # (1, TILE_B)
    diff = pred - gt
    err_ref[...] = diff * diff * jnp.log(jnp.abs(gt) + jnp.e)


# ------------------------------ JAX wrapper ----------------------------------

@functools.partial(jax.jit, static_argnames=("tile_b_cap",))
def weighted_regression_forward_and_loss(x, ground_truth_scores, params,
                                         tile_b_cap=4096):
    """Fused predictor forward + weighted-MSE loss.

    x:                   (B, D_in) f32 drug-pair features
    ground_truth_scores: (B,)      f32 synergy scores (drug_drug_batch[2])
    params:              [(W, b)] * 3, PyTorch Linear layout W:(out,in), b:(out,)
    returns (comb (B, 1) f32, weighted_loss scalar f32)
    """
    (w1, b1), (w2, b2), (w3, b3) = params
    B, d_in = x.shape
    h1, h2 = w1.shape[0], w2.shape[0]

    # ---- generation-aware tile sizing --------------------------------------
    # ~48 MiB scoped VMEM on v7x (64 MiB physical), ~96 MiB on v5e/v6e (128 MiB).
    vmem_limit = min((_PHYS_VMEM_BYTES * 3) // 4, 100 * 1024 * 1024)
    # Resident weights (assume double-buffered by the pipeliner) + headroom.
    weight_bytes = 2 * (2 * h1 * d_in + 4 * (h1 + h2 * h1 + h2 + h2 + 1))
    stream_budget = max(vmem_limit - weight_bytes - (6 << 20), 4 << 20)
    # Per batch-row VMEM cost, double-buffered: x (bf16) + gt/pred/err (f32).
    per_row_bytes = 2 * (2 * d_in + 3 * 4)
    tile_b = stream_budget // per_row_bytes
    tile_b = max(256, min(int(tile_b_cap), (tile_b // 256) * 256))
    tile_b = min(tile_b, _round_up(B, 256))

    b_pad = _round_up(B, tile_b)
    num_tiles = b_pad // tile_b

    # x streams in native (B, D_in) layout as bf16 (no transpose copy; halves
    # the dominant HBM stream).  Only a ragged batch tail is zero-padded.
    x_bf = x.astype(jnp.bfloat16)
    gt_row = ground_truth_scores.astype(jnp.float32).reshape(1, B)
    if b_pad != B:
        x_bf = jnp.pad(x_bf, ((0, b_pad - B), (0, 0)))
        gt_row = jnp.pad(gt_row, ((0, 0), (0, b_pad - B)))

    w1_bf = w1.astype(jnp.bfloat16)                 # layer-1 weights stream as bf16
    b1c = b1.reshape(h1, 1).astype(jnp.float32)
    w2f = w2.astype(jnp.float32)                    # tiny, resident: keep f32
    b2c = b2.reshape(h2, 1).astype(jnp.float32)
    w3c = w3.reshape(h2, 1).astype(jnp.float32)     # (1, H2) -> (H2, 1) column
    b3c = b3.reshape(1, 1).astype(jnp.float32)

    pred_pad, err_pad = pl.pallas_call(
        _fused_kernel,
        grid=(num_tiles,),
        in_specs=[
            pl.BlockSpec((tile_b, d_in), lambda i: (i, 0)),    # x tile (streamed, bf16)
            pl.BlockSpec((1, tile_b), lambda i: (0, i)),       # gt tile (streamed)
            pl.BlockSpec((h1, d_in), lambda i: (0, 0)),        # weights stay resident
            pl.BlockSpec((h1, 1), lambda i: (0, 0)),
            pl.BlockSpec((h2, h1), lambda i: (0, 0)),
            pl.BlockSpec((h2, 1), lambda i: (0, 0)),
            pl.BlockSpec((h2, 1), lambda i: (0, 0)),
            pl.BlockSpec((1, 1), lambda i: (0, 0)),
        ],
        out_specs=(
            pl.BlockSpec((1, tile_b), lambda i: (0, i)),       # lane-dense pred
            pl.BlockSpec((1, tile_b), lambda i: (0, i)),       # lane-dense weighted err
        ),
        out_shape=(
            jax.ShapeDtypeStruct((1, b_pad), jnp.float32),
            jax.ShapeDtypeStruct((1, b_pad), jnp.float32),
        ),
        compiler_params=pltpu.CompilerParams(
            # No cross-tile carry -> safe to shard across v7x TensorCores.
            dimension_semantics=("parallel",),
            vmem_limit_bytes=int(vmem_limit),
        ),
    )(x_bf, gt_row, w1_bf, b1c, w2f, b2c, w3c, b3c)

    comb = pred_pad[:, :B].T                       # (B, 1), module forward() output
    weighted_loss = jnp.sum(err_pad[0, :B]) / B    # mean over the true batch
    return comb, weighted_loss


# --------------------------- parameter construction --------------------------

def init_params(key, layer_sizes):
    """Deterministic PyTorch-nn.Linear-style init: W (out, in), b (out,)."""
    params = []
    for i, (d_in, d_out) in enumerate(zip(layer_sizes[:-1], layer_sizes[1:])):
        k_w, k_b = jax.random.split(jax.random.fold_in(key, i))
        scale = float(d_in) ** -0.5
        w = jax.random.uniform(k_w, (d_out, d_in), jnp.float32, -scale, scale)
        b = jax.random.uniform(k_b, (d_out,), jnp.float32, -scale, scale)
        params.append((w, b))
    return params


def _reference(x, gt, params):
    """Pure-JAX reference of the PyTorch forward + weighted-MSE loss."""
    h = x
    for i, (w, b) in enumerate(params):
        h = jnp.dot(h, w.T, precision=jax.lax.Precision.HIGHEST) + b
        if i < len(params) - 1:
            h = jnp.maximum(h, 0.0)
    pred = h                                        # (B, 1)
    gt2 = gt[:, None]
    loss = jnp.mean((pred - gt2) ** 2 * jnp.log(jnp.abs(gt2) + jnp.e))
    return pred, loss


def _check(batch, in_dim, key, tile_b_cap=4096):
    predictor_layers = [in_dim, 32, 16, 1]
    k_x, k_gt, k_p = jax.random.split(key, 3)
    x = jax.random.normal(k_x, (batch, in_dim), jnp.float32)
    ground_truth = jax.random.normal(k_gt, (batch,), jnp.float32) * 10.0
    params = init_params(k_p, predictor_layers)

    comb, wloss = weighted_regression_forward_and_loss(
        x, ground_truth, params, tile_b_cap=tile_b_cap)
    comb = jax.block_until_ready(comb)
    wloss = jax.block_until_ready(wloss)

    assert comb.shape == (batch, 1) and comb.dtype == jnp.float32
    assert wloss.shape == () and wloss.dtype == jnp.float32

    ref_pred, ref_loss = _reference(x, ground_truth, params)
    assert jnp.allclose(comb, ref_pred, rtol=2e-2, atol=2e-2), "pred mismatch"
    assert jnp.allclose(wloss, ref_loss, rtol=2e-2, atol=2e-2), "loss mismatch"


# ------------------------------------ main -----------------------------------

if __name__ == "__main__":
    key = jax.random.PRNGKey(0)

    # Small shapes consistent with the module: a batch of drug-pair feature
    # vectors and predictor_layers = [in_dim, 32, 16, 1].
    _check(batch=8, in_dim=32, key=jax.random.fold_in(key, 0))

    # Exercise the multi-tile "parallel" path (ragged batch, several grid
    # steps) with a small forced tile cap.
    _check(batch=600, in_dim=32, key=jax.random.fold_in(key, 1), tile_b_cap=256)

    # TODO(synk): the concrete predictor class comes from config['predictor'];
    # a generic MLP over drug-pair features is implemented here.
    print("KERNEL_OK")
</pallas_src>

<mosaic_0001>
module attributes {stable_mosaic.version = 11 : i64} {
  func.func @_fused_kernel(%arg0: i32, %arg1: memref<256x32xbf16, #tpu.memory_space<vmem>>, %arg2: memref<1x256xf32, #tpu.memory_space<vmem>>, %arg3: memref<32x32xbf16, #tpu.memory_space<vmem>>, %arg4: memref<32x1xf32, #tpu.memory_space<vmem>>, %arg5: memref<16x32xf32, #tpu.memory_space<vmem>>, %arg6: memref<16x1xf32, #tpu.memory_space<vmem>>, %arg7: memref<16x1xf32, #tpu.memory_space<vmem>>, %arg8: memref<1x1xf32, #tpu.memory_space<vmem>>, %arg9: memref<1x256xf32, #tpu.memory_space<vmem>>, %arg10: memref<1x256xf32, #tpu.memory_space<vmem>>) attributes {dimension_semantics = [#tpu.dimension_semantics<parallel>], iteration_bounds = array<i64: 1>, scalar_prefetch = 0 : i64, scratch_operands = 0 : i64, tpu.core_type = #tpu.core_type<tc>, window_params = [{transform_indices = @transform_0, window_bounds = array<i64: 256, 32>}, {transform_indices = @transform_1, window_bounds = array<i64: 1, 256>}, {pipeline_mode = #tpu.pipeline_mode<synchronous>, transform_indices = @transform_2, window_bounds = array<i64: 32, 32>}, {pipeline_mode = #tpu.pipeline_mode<synchronous>, transform_indices = @transform_3, window_bounds = array<i64: 32, 1>}, {pipeline_mode = #tpu.pipeline_mode<synchronous>, transform_indices = @transform_4, window_bounds = array<i64: 16, 32>}, {pipeline_mode = #tpu.pipeline_mode<synchronous>, transform_indices = @transform_5, window_bounds = array<i64: 16, 1>}, {pipeline_mode = #tpu.pipeline_mode<synchronous>, transform_indices = @transform_6, window_bounds = array<i64: 16, 1>}, {pipeline_mode = #tpu.pipeline_mode<synchronous>, transform_indices = @transform_7, window_bounds = array<i64: 1, 1>}, {transform_indices = @transform_8, window_bounds = array<i64: 1, 256>}, {transform_indices = @transform_9, window_bounds = array<i64: 1, 256>}]} {
    %c0 = arith.constant 0 : index
    %c0_0 = arith.constant 0 : index
    %0 = vector.load %arg3[%c0, %c0_0] : memref<32x32xbf16, #tpu.memory_space<vmem>>, vector<32x32xbf16>
    %c0_1 = arith.constant 0 : index
    %c0_2 = arith.constant 0 : index
    %1 = vector.load %arg1[%c0_1, %c0_2] : memref<256x32xbf16, #tpu.memory_space<vmem>>, vector<256x32xbf16>
    %cst = arith.constant dense<0.000000e+00> : vector<32x256xf32>
    %2 = tpu.matmul %0, %1, %cst {dimension_numbers = #tpu.dot_dimension_numbers<[1], [1], [0], [0], [0, 0, 1, 0], [], []>} : vector<32x32xbf16>, vector<256x32xbf16>, vector<32x256xf32> -> vector<32x256xf32>
    %c0_3 = arith.constant 0 : index
    %c0_4 = arith.constant 0 : index
    %3 = vector.load %arg4[%c0_3, %c0_4] : memref<32x1xf32, #tpu.memory_space<vmem>>, vector<32x1xf32>
    %4 = vector.broadcast %3 : vector<32x1xf32> to vector<32x256xf32>
    %5 = arith.addf %2, %4 : vector<32x256xf32>
    %cst_5 = arith.constant 0.000000e+00 : f32
    %6 = vector.broadcast %cst_5 : f32 to vector<32x256xf32>
    %7 = arith.maximumf %5, %6 : vector<32x256xf32>
    %c0_6 = arith.constant 0 : index
    %c0_7 = arith.constant 0 : index
    %8 = vector.load %arg5[%c0_6, %c0_7] : memref<16x32xf32, #tpu.memory_space<vmem>>, vector<16x32xf32>
    %cst_8 = arith.constant dense<0.000000e+00> : vector<16x256xf32>
    %9 = tpu.matmul %8, %7, %cst_8 {dimension_numbers = #tpu.dot_dimension_numbers<[1], [0], [0], [1], [0, 0, 1, 1], [], []>} : vector<16x32xf32>, vector<32x256xf32>, vector<16x256xf32> -> vector<16x256xf32>
    %c0_9 = arith.constant 0 : index
    %c0_10 = arith.constant 0 : index
    %10 = vector.load %arg6[%c0_9, %c0_10] : memref<16x1xf32, #tpu.memory_space<vmem>>, vector<16x1xf32>
    %11 = vector.broadcast %10 : vector<16x1xf32> to vector<16x256xf32>
    %12 = arith.addf %9, %11 : vector<16x256xf32>
    %cst_11 = arith.constant 0.000000e+00 : f32
    %13 = vector.broadcast %cst_11 : f32 to vector<16x256xf32>
    %14 = arith.maximumf %12, %13 : vector<16x256xf32>
    %c0_12 = arith.constant 0 : index
    %c0_13 = arith.constant 0 : index
    %15 = vector.load %arg7[%c0_12, %c0_13] : memref<16x1xf32, #tpu.memory_space<vmem>>, vector<16x1xf32>
    %16 = vector.broadcast %15 : vector<16x1xf32> to vector<16x256xf32>
    %17 = arith.mulf %14, %16 : vector<16x256xf32>
    %cst_14 = arith.constant dense<0.000000e+00> : vector<256xf32>
    %18 = vector.multi_reduction <add>, %17, %cst_14 [0] : vector<16x256xf32> to vector<256xf32>
    %19 = vector.shape_cast %18 : vector<256xf32> to vector<1x256xf32>
    %c0_15 = arith.constant 0 : index
    %c0_16 = arith.constant 0 : index
    %20 = vector.load %arg8[%c0_15, %c0_16] : memref<1x1xf32, #tpu.memory_space<vmem>>, vector<1x1xf32>
    %21 = vector.broadcast %20 : vector<1x1xf32> to vector<1x256xf32>
    %22 = arith.addf %19, %21 : vector<1x256xf32>
    %c0_17 = arith.constant 0 : index
    %c0_18 = arith.constant 0 : index
    %23 = vector.load %arg9[%c0_17, %c0_18] : memref<1x256xf32, #tpu.memory_space<vmem>>, vector<1x256xf32>
    tpu.vector_store %arg9[%c0_17, %c0_18], %22 {strides = array<i32>} : memref<1x256xf32, #tpu.memory_space<vmem>>, vector<1x256xf32>,
    %c0_19 = arith.constant 0 : index
    %c0_20 = arith.constant 0 : index
    %24 = vector.load %arg2[%c0_19, %c0_20] : memref<1x256xf32, #tpu.memory_space<vmem>>, vector<1x256xf32>
    %25 = arith.subf %22, %24 : vector<1x256xf32>
    %26 = arith.mulf %25, %25 : vector<1x256xf32>
    %27 = math.absf %24 : vector<1x256xf32>
    %cst_21 = arith.constant 2.71828175 : f32
    %28 = vector.broadcast %cst_21 : f32 to vector<1x256xf32>
    %29 = arith.addf %27, %28 : vector<1x256xf32>
    %30 = math.log %29 : vector<1x256xf32>
    %31 = arith.mulf %26, %30 : vector<1x256xf32>
    %c0_22 = arith.constant 0 : index
    %c0_23 = arith.constant 0 : index
    %32 = vector.load %arg10[%c0_22, %c0_23] : memref<1x256xf32, #tpu.memory_space<vmem>>, vector<1x256xf32>
    tpu.vector_store %arg10[%c0_22, %c0_23], %31 {strides = array<i32>} : memref<1x256xf32, #tpu.memory_space<vmem>>, vector<1x256xf32>,
    return
  }
  func.func @transform_0(%arg0: i32) -> (i32, i32) {
    %c0_i32 = arith.constant 0 : i32
    %c0_i32_0 = arith.constant 0 : i32
    return %arg0, %c0_i32 : i32, i32
  }
  func.func @transform_1(%arg0: i32) -> (i32, i32) {
    %c0_i32 = arith.constant 0 : i32
    %c0_i32_0 = arith.constant 0 : i32
    return %c0_i32, %arg0 : i32, i32
  }
  func.func @transform_2(%arg0: i32) -> (i32, i32) {
    %c0_i32 = arith.constant 0 : i32
    %c0_i32_0 = arith.constant 0 : i32
    %c0_i32_1 = arith.constant 0 : i32
    return %c0_i32, %c0_i32_0 : i32, i32
  }
  func.func @transform_3(%arg0: i32) -> (i32, i32) {
    %c0_i32 = arith.constant 0 : i32
    %c0_i32_0 = arith.constant 0 : i32
    %c0_i32_1 = arith.constant 0 : i32
    return %c0_i32, %c0_i32_0 : i32, i32
  }
  func.func @transform_4(%arg0: i32) -> (i32, i32) {
    %c0_i32 = arith.constant 0 : i32
    %c0_i32_0 = arith.constant 0 : i32
    %c0_i32_1 = arith.constant 0 : i32
    return %c0_i32, %c0_i32_0 : i32, i32
  }
  func.func @transform_5(%arg0: i32) -> (i32, i32) {
    %c0_i32 = arith.constant 0 : i32
    %c0_i32_0 = arith.constant 0 : i32
    %c0_i32_1 = arith.constant 0 : i32
    return %c0_i32, %c0_i32_0 : i32, i32
  }
  func.func @transform_6(%arg0: i32) -> (i32, i32) {
    %c0_i32 = arith.constant 0 : i32
    %c0_i32_0 = arith.constant 0 : i32
    %c0_i32_1 = arith.constant 0 : i32
    return %c0_i32, %c0_i32_0 : i32, i32
  }
  func.func @transform_7(%arg0: i32) -> (i32, i32) {
    %c0_i32 = arith.constant 0 : i32
    %c0_i32_0 = arith.constant 0 : i32
    %c0_i32_1 = arith.constant 0 : i32
    return %c0_i32, %c0_i32_0 : i32, i32
  }
  func.func @transform_8(%arg0: i32) -> (i32, i32) {
    %c0_i32 = arith.constant 0 : i32
    %c0_i32_0 = arith.constant 0 : i32
    return %c0_i32, %arg0 : i32, i32
  }
  func.func @transform_9(%arg0: i32) -> (i32, i32) {
    %c0_i32 = arith.constant 0 : i32
    %c0_i32_0 = arith.constant 0 : i32
    return %c0_i32, %arg0 : i32, i32
  }
}

</mosaic_0001>

<llo_original>
// kernel: weighted_regression_forward_and_loss.1
$region0: #{weighted_regression_forward_and_loss.1}
  #allocation0 [shape = 'u32[]', space=smem, size = 0x4, offset = 0x4, fixed_abs, tag = 'smem constant byte address 0x4 - core index']
  #allocation1 [shape = 'u32[72,128]{1,0:T(1,128)}', space=vmem, size = 0x9000, scoped, tag = 'internal scratch']
  #allocation2 [shape = 'f32[1,1]{1,0:T(1,128)S(1)}', space=vmem, size = 0x200, scoped, tag = 'scoped memory for weighted_regression_forward_and_loss.1']
  %s0 = inlined_call_operand.vmem [shape: bf16[256,32], index: 0, kind: input, shape index: {}]
  %s1 = inlined_call_operand.vmem [shape: f32[1,256], index: 1, kind: input, shape index: {}]
  %s2 = inlined_call_operand.vmem [shape: bf16[32,32], index: 2, kind: input, shape index: {}]
  %s3 = inlined_call_operand.vmem [shape: f32[32,1], index: 3, kind: input, shape index: {}]
  %s4 = inlined_call_operand.vmem [shape: f32[16,32], index: 4, kind: input, shape index: {}]
  %s5 = inlined_call_operand.vmem [shape: f32[16,1], index: 5, kind: input, shape index: {}]
  %s6 = inlined_call_operand.vmem [shape: f32[16,1], index: 6, kind: input, shape index: {}]
  %s7 = inlined_call_operand.<no memory space> [shape: f32[1,1], index: 7, kind: input, shape index: {}]
  %s8 = inlined_call_operand.vmem [shape: f32[1,256], index: 8, kind: output, shape index: {0}]
  %s9 = inlined_call_operand.vmem [shape: f32[1,256], index: 9, kind: output, shape index: {1}]
  %10 = xla_tuple %s8, %s9
  %s11 = sld [smem:[#allocation0]]
  $region50: #{weighted_regression_forward_and_loss.1} parent=0
    _
  %s13 = ssub.s32 1, %s11
  %s14 = scalar_select 0, %s13, %s11
  %v15 = vstv %s7
  %16 = vst [vmem:[#allocation2] sm:$0x1] %v15
  // Predicated region
  $region2: #{weighted_regression_forward_and_loss.1} parent=0 // pred_check
    _
  $region3: #{weighted_regression_forward_and_loss.1} parent=0 // pred_check_branch
    %18 = sbr.rel (0) target = $region5
  $region4: #{weighted_regression_forward_and_loss.1} parent=0 // pred_region
    _
  $region5: #{weighted_regression_forward_and_loss.1} parent=0 // pred_fallthru
    _
  // Predicated region
  $region6: #{weighted_regression_forward_and_loss.1} parent=0 // pred_check
    _
  $region7: #{weighted_regression_forward_and_loss.1} parent=0 // pred_check_branch
    %20 = sbr.rel (0) target = $region9
  $region8: #{weighted_regression_forward_and_loss.1} parent=0 // pred_region
    _
  $region9: #{weighted_regression_forward_and_loss.1} parent=0 // pred_fallthru
    _
  // Predicated region
  $region10: #{weighted_regression_forward_and_loss.1} parent=0 // pred_check
    _
  $region11: #{weighted_regression_forward_and_loss.1} parent=0 // pred_check_branch
    %22 = sbr.rel (0) target = $region13
  $region12: #{weighted_regression_forward_and_loss.1} parent=0 // pred_region
    _
  $region13: #{weighted_regression_forward_and_loss.1} parent=0 // pred_fallthru
    _
  // Predicated region
  $region14: #{weighted_regression_forward_and_loss.1} parent=0 // pred_check
    _
  $region15: #{weighted_regression_forward_and_loss.1} parent=0 // pred_check_branch
    %24 = sbr.rel (0) target = $region17
  $region16: #{weighted_regression_forward_and_loss.1} parent=0 // pred_region
    _
  $region17: #{weighted_regression_forward_and_loss.1} parent=0 // pred_fallthru
    _
  // Predicated region
  $region18: #{weighted_regression_forward_and_loss.1} parent=0 // pred_check
    _
  $region19: #{weighted_regression_forward_and_loss.1} parent=0 // pred_check_branch
    %26 = sbr.rel (0) target = $region21
  $region20: #{weighted_regression_forward_and_loss.1} parent=0 // pred_region
    _
  $region21: #{weighted_regression_forward_and_loss.1} parent=0 // pred_fallthru
    _
  // Predicated region
  $region22: #{weighted_regression_forward_and_loss.1} parent=0 // pred_check
    _
  $region23: #{weighted_regression_forward_and_loss.1} parent=0 // pred_check_branch
    %28 = sbr.rel (0) target = $region25
  $region24: #{weighted_regression_forward_and_loss.1} parent=0 // pred_region
    _
  $region25: #{weighted_regression_forward_and_loss.1} parent=0 // pred_fallthru
    _
  // Predicated region
  $region26: #{weighted_regression_forward_and_loss.1} parent=0 // pred_check
    _
  $region27: #{weighted_regression_forward_and_loss.1} parent=0 // pred_check_branch
    %30 = sbr.rel (0) target = $region29
  $region28: #{weighted_regression_forward_and_loss.1} parent=0 // pred_region
    _
  $region29: #{weighted_regression_forward_and_loss.1} parent=0 // pred_fallthru
    _
  // Predicated region
  $region30: #{weighted_regression_forward_and_loss.1} parent=0 // pred_check
    _
  $region31: #{weighted_regression_forward_and_loss.1} parent=0 // pred_check_branch
    %32 = sbr.rel (0) target = $region33
  $region32: #{weighted_regression_forward_and_loss.1} parent=0 // pred_region
    _
  $region33: #{weighted_regression_forward_and_loss.1} parent=0 // pred_fallthru
    _
  %v33 = vld [vmem:[%s2] sm:$0xf]
  %v34 = vld [vmem:[%s2 + $0x4] sm:$0xf]
  %v35 = vld [vmem:[%s2 + $0x8] sm:$0xf]
  %v36 = vld [vmem:[%s2 + $0xc] sm:$0xf]
  %v37 = vld [vmem:[%s0] sm:$0xf]
  %v38 = vld [vmem:[%s0 + $0x4] sm:$0xf]
  %v39 = vld [vmem:[%s0 + $0x8] sm:$0xf]
  %v40 = vld [vmem:[%s0 + $0xc] sm:$0xf]
  %v41 = vld [vmem:[%s0 + $0x10] sm:$0xf]
  %v42 = vld [vmem:[%s0 + $0x14] sm:$0xf]
  %v43 = vld [vmem:[%s0 + $0x18] sm:$0xf]
  %v44 = vld [vmem:[%s0 + $0x1c] sm:$0xf]
  %v45 = vld [vmem:[%s0 + $0x20] sm:$0xf]
  %v46 = vld [vmem:[%s0 + $0x24] sm:$0xf]
  %v47 = vld [vmem:[%s0 + $0x28] sm:$0xf]
  %v48 = vld [vmem:[%s0 + $0x2c] sm:$0xf]
  %v49 = vld [vmem:[%s0 + $0x30] sm:$0xf]
  %v50 = vld [vmem:[%s0 + $0x34] sm:$0xf]
  %v51 = vld [vmem:[%s0 + $0x38] sm:$0xf]
  %v52 = vld [vmem:[%s0 + $0x3c] sm:$0xf]
  %v53 = vld [vmem:[%s0 + $0x40] sm:$0xf]
  %v54 = vld [vmem:[%s0 + $0x44] sm:$0xf]
  %v55 = vld [vmem:[%s0 + $0x48] sm:$0xf]
  %v56 = vld [vmem:[%s0 + $0x4c] sm:$0xf]
  %v57 = vld [vmem:[%s0 + $0x50] sm:$0xf]
  %v58 = vld [vmem:[%s0 + $0x54] sm:$0xf]
  %v59 = vld [vmem:[%s0 + $0x58] sm:$0xf]
  %v60 = vld [vmem:[%s0 + $0x5c] sm:$0xf]
  %v61 = vld [vmem:[%s0 + $0x60] sm:$0xf]
  %v62 = vld [vmem:[%s0 + $0x64] sm:$0xf]
  %v63 = vld [vmem:[%s0 + $0x68] sm:$0xf]
  %v64 = vld [vmem:[%s0 + $0x6c] sm:$0xf]
  %v65 = vld [vmem:[%s0 + $0x70] sm:$0xf]
  %v66 = vld [vmem:[%s0 + $0x74] sm:$0xf]
  %v67 = vld [vmem:[%s0 + $0x78] sm:$0xf]
  %v68 = vld [vmem:[%s0 + $0x7c] sm:$0xf]
  %v69 = vld [vmem:[%s3] sm:$0xff]
  %v70 = vld [vmem:[%s3 + $0x8] sm:$0xff]
  %v71 = vld [vmem:[%s3 + $0x10] sm:$0xff]
  %v72 = vld [vmem:[%s3 + $0x18] sm:$0xff]
  %74 = vset.pattern.permute.xlu0 0
  %75 = vperm.xlu0 %74, %v69
  %v76 = vpop.permute.xlu0 %75
  %79 = vset.pattern.permute.xlu0 0
  %80 = vperm.xlu0 %79, %v70
  %v81 = vpop.permute.xlu0 %80
  %84 = vset.pattern.permute.xlu0 0
  %85 = vperm.xlu0 %84, %v71
  %v86 = vpop.permute.xlu0 %85
  %89 = vset.pattern.permute.xlu0 0
  %90 = vperm.xlu0 %89, %v72
  %v91 = vpop.permute.xlu0 %90
  %v97 = vunpack.c.l.b16 %v33
  %v98 = vunpack.c.l.b16 %v34
  %v99 = vunpack.c.l.b16 %v35
  %v100 = vunpack.c.l.b16 %v36
  %v101 = vpack.c.b16 %v98, %v97
  %v102 = vpack.c.b16 %v100, %v99
  %v135 = vunpack.c.l.b16 %v37
  %v136 = vunpack.c.l.b16 %v38
  %v137 = vunpack.c.l.b16 %v39
  %v138 = vunpack.c.l.b16 %v40
  %v139 = vunpack.c.l.b16 %v41
  %v140 = vunpack.c.l.b16 %v42
  %v141 = vunpack.c.l.b16 %v43
  %v142 = vunpack.c.l.b16 %v44
  %v143 = vunpack.c.l.b16 %v45
  %v144 = vunpack.c.l.b16 %v46
  %v145 = vunpack.c.l.b16 %v47
  %v146 = vunpack.c.l.b16 %v48
  %v147 = vunpack.c.l.b16 %v49
  %v148 = vunpack.c.l.b16 %v50
  %v149 = vunpack.c.l.b16 %v51
  %v150 = vunpack.c.l.b16 %v52
  %v151 = vunpack.c.l.b16 %v53
  %v152 = vunpack.c.l.b16 %v54
  %v153 = vunpack.c.l.b16 %v55
  %v154 = vunpack.c.l.b16 %v56
  %v155 = vunpack.c.l.b16 %v57
  %v156 = vunpack.c.l.b16 %v58
  %v157 = vunpack.c.l.b16 %v59
  %v158 = vunpack.c.l.b16 %v60
  %v159 = vunpack.c.l.b16 %v61
  %v160 = vunpack.c.l.b16 %v62
  %v161 = vunpack.c.l.b16 %v63
  %v162 = vunpack.c.l.b16 %v64
  %v163 = vunpack.c.l.b16 %v65
  %v164 = vunpack.c.l.b16 %v66
  %v165 = vunpack.c.l.b16 %v67
  %v166 = vunpack.c.l.b16 %v68
  %v167 = vpack.c.b16 %v136, %v135
  %v168 = vpack.c.b16 %v138, %v137
  %v169 = vpack.c.b16 %v140, %v139
  %v170 = vpack.c.b16 %v142, %v141
  %v171 = vpack.c.b16 %v144, %v143
  %v172 = vpack.c.b16 %v146, %v145
  %v173 = vpack.c.b16 %v148, %v147
  %v174 = vpack.c.b16 %v150, %v149
  %v175 = vpack.c.b16 %v152, %v151
  %v176 = vpack.c.b16 %v154, %v153
  %v177 = vpack.c.b16 %v156, %v155
  %v178 = vpack.c.b16 %v158, %v157
  %v179 = vpack.c.b16 %v160, %v159
  %v180 = vpack.c.b16 %v162, %v161
  %v181 = vpack.c.b16 %v164, %v163
  %v182 = vpack.c.b16 %v166, %v165
  %vm183 = vcmask 261120
  %v185 = vsel %vm183, %v101, 0
  %v188 = vsel %vm183, %v102, 0
  %v191 = vsel %vm183, %v167, 0
  %v194 = vsel %vm183, %v168, 0
  %v197 = vsel %vm183, %v169, 0
  %v200 = vsel %vm183, %v170, 0
  %v203 = vsel %vm183, %v171, 0
  %v206 = vsel %vm183, %v172, 0
  %v209 = vsel %vm183, %v173, 0
  %v212 = vsel %vm183, %v174, 0
  %v215 = vsel %vm183, %v175, 0
  %v218 = vsel %vm183, %v176, 0
  %v221 = vsel %vm183, %v177, 0
  %v224 = vsel %vm183, %v178, 0
  %v227 = vsel %vm183, %v179, 0
  %v230 = vsel %vm183, %v180, 0
  %v233 = vsel %vm183, %v181, 0
  %v236 = vsel %vm183, %v182, 0
  %238 = vmatpush.bf16.xpose.msra.mxu0 %v212
  %239 = vmatpush.bf16.xpose.msra.mxu0 %v209
  %240 = vmatpush.bf16.xpose.msra.mxu0 %v206
  %241 = vmatpush.bf16.xpose.msra.mxu0 %v203
  %242 = vmatpush.bf16.xpose.msra.mxu0 %v200
  %243 = vmatpush.bf16.xpose.msra.mxu0 %v197
  %244 = vmatpush.bf16.xpose.msra.mxu0 %v194
  %245 = vmatpush.bf16.xpose.msra.mxu0 %v191
  %246 = vmatmul.bf16.gmra.mxu0 %v185
  %v247 = vpop.f32.mrf.mxu0
  %v248 = vadd.f32 %v76, %v247
  %v249 = vpop.f32.mrf.mxu0
  %v250 = vadd.f32 %v81, %v249
  %251 = vmatmul.bf16.gmra.mxu0 %v188
  %v252 = vpop.f32.mrf.mxu0
  %v253 = vadd.f32 %v86, %v252
  %v254 = vpop.f32.mrf.mxu0
  %v255 = vadd.f32 %v91, %v254
  %256 = vdwg.mxu0
  %257 = vmatpush.bf16.xpose.msra.mxu0 %v236
  %258 = vmatpush.bf16.xpose.msra.mxu0 %v233
  %259 = vmatpush.bf16.xpose.msra.mxu0 %v230
  %260 = vmatpush.bf16.xpose.msra.mxu0 %v227
  %261 = vmatpush.bf16.xpose.msra.mxu0 %v224
  %262 = vmatpush.bf16.xpose.msra.mxu0 %v221
  %263 = vmatpush.bf16.xpose.msra.mxu0 %v218
  %264 = vmatpush.bf16.xpose.msra.mxu0 %v215
  %265 = vmatmul.bf16.gmra.mxu0 %v185
  %v266 = vpop.f32.mrf.mxu0
  %v267 = vadd.f32 %v76, %v266
  %v268 = vpop.f32.mrf.mxu0
  %v269 = vadd.f32 %v81, %v268
  %270 = vmatmul.bf16.gmra.mxu0 %v188
  %v271 = vpop.f32.mrf.mxu0
  %v272 = vadd.f32 %v86, %v271
  %v273 = vpop.f32.mrf.mxu0
  %v274 = vadd.f32 %v91, %v273
  %275 = vdwg.mxu0
  %v276 = vmax.f32 %v248, 0.0
  %v277 = vmax.f32 %v267, 0.0
  %v278 = vmax.f32 %v250, 0.0
  %v279 = vmax.f32 %v269, 0.0
  %v280 = vmax.f32 %v253, 0.0
  %v281 = vmax.f32 %v272, 0.0
  %v282 = vmax.f32 %v255, 0.0
  %v283 = vmax.f32 %v274, 0.0
  %v284 = vld [vmem:[%s4] sm:$0xff]
  %v285 = vld [vmem:[%s4 + $0x8] sm:$0xff]
  %v286 = vld [vmem:[%s5] sm:$0xff]
  %v287 = vld [vmem:[%s5 + $0x8] sm:$0xff]
  %289 = vset.pattern.permute.xlu0 0
  %290 = vperm.xlu0 %289, %v286
  %v291 = vpop.permute.xlu0 %290
  %294 = vset.pattern.permute.xlu0 0
  %295 = vperm.xlu0 %294, %v287
  %v296 = vpop.permute.xlu0 %295
  %v299 = vsel %vm183, %v284, 0
  %v302 = vsel %vm183, %v285, 0
  %304 = vmatpush.msra.mxu0 0.0
  %305 = vmatpush.msra.mxu0 0.0
  %306 = vmatpush.msra.mxu0 0.0
  %307 = vmatpush.msra.mxu0 0.0
  %308 = vmatpush.msra.mxu0 0.0
  %309 = vmatpush.msra.mxu0 0.0
  %310 = vmatpush.msra.mxu0 0.0
  %311 = vmatpush.msra.mxu0 0.0
  %312 = vmatpush.msra.mxu0 0.0
  %313 = vmatpush.msra.mxu0 0.0
  %314 = vmatpush.msra.mxu0 0.0
  %315 = vmatpush.msra.mxu0 0.0
  %316 = vmatpush.msra.mxu0 %v282
  %317 = vmatpush.msra.mxu0 %v280
  %318 = vmatpush.msra.mxu0 %v278
  %319 = vmatpush.msra.mxu0 %v276
  %320 = vmatmul.f32.gmra.mxu0 %v299
  %v321 = vpop.f32.mrf.mxu0
  %v322 = vadd.f32 %v291, %v321
  %323 = vmatmul.f32.gmra.mxu0 %v302
  %v324 = vpop.f32.mrf.mxu0
  %v325 = vadd.f32 %v296, %v324
  %326 = vdwg.mxu0
  %327 = vmatpush.msra.mxu0 0.0
  %328 = vmatpush.msra.mxu0 0.0
  %329 = vmatpush.msra.mxu0 0.0
  %330 = vmatpush.msra.mxu0 0.0
  %331 = vmatpush.msra.mxu0 0.0
  %332 = vmatpush.msra.mxu0 0.0
  %333 = vmatpush.msra.mxu0 0.0
  %334 = vmatpush.msra.mxu0 0.0
  %335 = vmatpush.msra.mxu0 0.0
  %336 = vmatpush.msra.mxu0 0.0
  %337 = vmatpush.msra.mxu0 0.0
  %338 = vmatpush.msra.mxu0 0.0
  %339 = vmatpush.msra.mxu0 %v283
  %340 = vmatpush.msra.mxu0 %v281
  %341 = vmatpush.msra.mxu0 %v279
  %342 = vmatpush.msra.mxu0 %v277
  %343 = vmatmul.f32.gmra.mxu0 %v299
  %v344 = vpop.f32.mrf.mxu0
  %v345 = vadd.f32 %v291, %v344
  %346 = vmatmul.f32.gmra.mxu0 %v302
  %v347 = vpop.f32.mrf.mxu0
  %v348 = vadd.f32 %v296, %v347
  %349 = vdwg.mxu0
  %v350 = vmax.f32 %v322, 0.0
  %v351 = vmax.f32 %v345, 0.0
  %v352 = vmax.f32 %v325, 0.0
  %v353 = vmax.f32 %v348, 0.0
  %v354 = vld [vmem:[%s6] sm:$0xff]
  %v355 = vld [vmem:[%s6 + $0x8] sm:$0xff]
  %357 = vset.pattern.permute.xlu0 0
  %358 = vperm.xlu0 %357, %v354
  %v359 = vpop.permute.xlu0 %358
  %362 = vset.pattern.permute.xlu0 0
  %363 = vperm.xlu0 %362, %v355
  %v364 = vpop.permute.xlu0 %363
  %v366 = vmul.f32 %v350, %v359
  %v367 = vmul.f32 %v351, %v359
  %v368 = vmul.f32 %v352, %v364
  %v369 = vmul.f32 %v353, %v364
  %v370 = vadd.f32 %v366, %v368
  %v371 = vrot.slane %v370, 4
  %v372 = vadd.f32 %v370, %v371
  %v373 = vrot.slane %v372, 2
  %v374 = vadd.f32 %v372, %v373
  %v375 = vrot.slane %v374, 1
  %v376 = vadd.f32 %v374, %v375
  %v377 = vadd.f32 %v367, %v369
  %v378 = vrot.slane %v377, 4
  %v379 = vadd.f32 %v377, %v378
  %v380 = vrot.slane %v379, 2
  %v381 = vadd.f32 %v379, %v380
  %v382 = vrot.slane %v381, 1
  %v383 = vadd.f32 %v381, %v382
  %v384 = vld [vmem:[#allocation2] sm:$0x1]
  %386 = vset.pattern.permute.xlu0 0
  %387 = vperm.xlu0 %386, %v384
  %v388 = vpop.permute.xlu0 %387
  %v390 = vperm.slane %v388, 0
  %v391 = vadd.f32 %v376, %v390
  %v392 = vadd.f32 %v383, %v390
  %v395 = vrot.slane %v392, 7
  %vm396 = vcmask 1040384
  %v397 = vsel %vm396, %v391, %v395
  %v399 = vlaneseq
  %vm400 = vcmp.ge.s32.totalorder %v399, 0
  %vm401 = vcmp.lt.s32.totalorder %v399, 256
  %vm402 = vmand %vm400, %vm401
  %403 = vst.msk [vmem:[%s8] sm:$0x3] %vm402, %v397
  %v404 = vld [vmem:[%s1] sm:$0x3]
  %v406 = vperm.slane %v404, 0
  %v407 = vperm.slane %v404, 1
  %v410 = vsub.f32 %v391, %v406
  %v411 = vsub.f32 %v392, %v407
  %v412 = vmul.f32 %v410, %v410
  %v413 = vmul.f32 %v411, %v411
  %v414 = vand.u32 2147483647, %v404
  %v415 = vadd.f32 %v414, 2.7182817
  %v416 = vlog2.pop %v415
  %v417 = vmul.f32 %v416, 0.6931472
  %v419 = vperm.slane %v417, 0
  %v420 = vperm.slane %v417, 1
  %v423 = vmul.f32 %v412, %v419
  %v424 = vmul.f32 %v413, %v420
  %v427 = vrot.slane %v424, 7
  %v428 = vsel %vm396, %v423, %v427
  %430 = vst.msk [vmem:[%s9] sm:$0x3] %vm402, %v428
  // Predicated region
  $region34: #{weighted_regression_forward_and_loss.1} parent=0 // pred_check
    _
  $region35: #{weighted_regression_forward_and_loss.1} parent=0 // pred_check_branch
    %432 = sbr.rel (0) target = $region37
  $region36: #{weighted_regression_forward_and_loss.1} parent=0 // pred_region
    _
  $region37: #{weighted_regression_forward_and_loss.1} parent=0 // pred_fallthru
    _
  // Predicated region
  $region38: #{weighted_regression_forward_and_loss.1} parent=0 // pred_check
    _
  $region39: #{weighted_regression_forward_and_loss.1} parent=0 // pred_check_branch
    %434 = sbr.rel (0) target = $region41
  $region40: #{weighted_regression_forward_and_loss.1} parent=0 // pred_region
    _
  $region41: #{weighted_regression_forward_and_loss.1} parent=0 // pred_fallthru
    _
  // Predicated region
  $region42: #{weighted_regression_forward_and_loss.1} parent=0 // pred_check
    _
  $region43: #{weighted_regression_forward_and_loss.1} parent=0 // pred_check_branch
    %436 = sbr.rel (0) target = $region45
  $region44: #{weighted_regression_forward_and_loss.1} parent=0 // pred_region
    _
  $region45: #{weighted_regression_forward_and_loss.1} parent=0 // pred_fallthru
    _
  // Predicated region
  $region46: #{weighted_regression_forward_and_loss.1} parent=0 // pred_check
    _
  $region47: #{weighted_regression_forward_and_loss.1} parent=0 // pred_check_branch
    %438 = sbr.rel (0) target = $region49
  $region48: #{weighted_regression_forward_and_loss.1} parent=0 // pred_region
    _
  $region49: #{weighted_regression_forward_and_loss.1} parent=0 // pred_fallthru
    _

</llo_original>
